<compile_context>
chip_gen: v7x
topology: tpu7x:2x2x1
jax: 0.10.0
libtpu: 0.0.40
codegen_flags: <defaults>
</compile_context>

<pallas_src>
import jax
import jax.numpy as jnp
from jax.experimental import pallas as pl
from jax.experimental.pallas import tpu as pltpu


def _round_up(x: int, m: int) -> int:
    return ((x + m - 1) // m) * m


def _compiler_params(semantics, vmem_bytes: int) -> pltpu.CompilerParams:
    return pltpu.CompilerParams(
        dimension_semantics=semantics,
        vmem_limit_bytes=int(max(vmem_bytes, 32 * 1024 * 1024)))


# ----------------------------------------------------------------------------
# Kernels: zero the resident output block at k==0, accumulate over the K axis.
# ----------------------------------------------------------------------------
def _make_matmul_kernel(k_axis: int):
    """C[i,j] += A[i,k] @ B[k,j]; output block stays resident across k."""
    def kernel(a_ref, b_ref, o_ref):
        @pl.when(pl.program_id(k_axis) == 0)
        def _():
            o_ref[...] = jnp.zeros_like(o_ref)

        o_ref[...] += jnp.dot(a_ref[...], b_ref[...],
                              preferred_element_type=jnp.float32)
    return kernel


def _gram_pair_kernel(bi_ref, bj_ref, a_ref, b_ref, o_ref):
    """One block-upper-triangular (bi, bj) tile of G = Xᵀ X, accumulated over k.

    a_ref is a (ti, tk) tile of Xᵀ (pre-transposed once in the wrapper), b_ref
    a (tk, ti) tile of X, so the contraction is a plain matmul on the MXU.
    The scalar-prefetch refs (bi_ref, bj_ref) are consumed by the index_maps.
    """
    @pl.when(pl.program_id(1) == 0)
    def _():
        o_ref[...] = jnp.zeros_like(o_ref)

    o_ref[...] += jnp.dot(a_ref[...], b_ref[...],
                          preferred_element_type=o_ref.dtype)


# ----------------------------------------------------------------------------
# Gram matrix G = X^T @ X (training path), symmetry-aware.
# ----------------------------------------------------------------------------
def _gram_dtypes():
    """Chip-aware (input, accumulator) dtype for the binary interaction matrix."""
    try:
        kind = jax.devices()[0].device_kind.lower()
    except Exception:
        kind = ""
    if "v7" in kind:
        # v7x MXU has bf16+fp8 only (no int8); 0/1 are exact in fp8-e4m3.
        return jnp.float8_e4m3fn, jnp.float32
    if "v5" in kind or "v6" in kind:
        # int8 MXU ≈ 2× bf16 rate and half the HBM bytes; 0/1 exact, int32 acc exact.
        return jnp.int8, jnp.int32
    # Safe fallback (binary 0/1 exact in bf16, f32 accumulation).
    return jnp.bfloat16, jnp.float32


def pallas_gram(X: jax.Array, *, ti_target: int = 1024,
                tk_target: int = 512) -> jax.Array:
    """G = X^T @ X in float32, computing only the block-upper triangle."""
    U, I = X.shape
    in_dtype, acc_dtype = _gram_dtypes()

    ti = min(ti_target, _round_up(I, 128))   # item tile (both output axes)
    tk = min(tk_target, _round_up(U, 128))   # user (contraction) tile
    Ip, Up = _round_up(I, ti), _round_up(U, tk)

    Xq = X.astype(in_dtype)                  # binary 0/1: exact in all dtypes above
    if (Up, Ip) != (U, I):
        Xq = jnp.pad(Xq, ((0, Up - U), (0, Ip - I)))
    # Pre-transpose once (O(U*I), negligible vs. the Gram) so the kernel never
    # needs a per-step transposed-LHS contraction / XLU transpose.
    Xt = Xq.T

    nb = Ip // ti
    pairs = [(i, j) for i in range(nb) for j in range(i, nb)]
    bi = jnp.asarray([p[0] for p in pairs], dtype=jnp.int32)
    bj = jnp.asarray([p[1] for p in pairs], dtype=jnp.int32)

    isz = jnp.dtype(in_dtype).itemsize
    osz = jnp.dtype(acc_dtype).itemsize
    vmem = 4 * ti * tk * isz + 2 * ti * ti * osz + (4 << 20)

    out = pl.pallas_call(
        _gram_pair_kernel,
        out_shape=jax.ShapeDtypeStruct((Ip, Ip), acc_dtype),
        grid_spec=pltpu.PrefetchScalarGridSpec(
            num_scalar_prefetch=2,
            grid=(len(pairs), Up // tk),
            in_specs=[
                pl.BlockSpec((ti, tk), lambda p, k, bi_r, bj_r: (bi_r[p], k)),
                pl.BlockSpec((tk, ti), lambda p, k, bi_r, bj_r: (k, bj_r[p])),
            ],
            out_specs=pl.BlockSpec((ti, ti),
                                   lambda p, k, bi_r, bj_r: (bi_r[p], bj_r[p])),
        ),
        compiler_params=_compiler_params(("arbitrary", "arbitrary"), vmem),
    )(bi, bj, Xt, Xq)

    # Mirror the strict block-lower triangle from the computed upper blocks
    # (unwritten lower blocks are never read: the select takes the transpose).
    blk = jnp.arange(Ip, dtype=jnp.int32) // ti
    is_upper = blk[:, None] <= blk[None, :]
    gram = jnp.where(is_upper, out, out.T).astype(jnp.float32)
    return gram[:I, :I]


# ----------------------------------------------------------------------------
# EASE "training" path: build the item-item matrix + one-time inference prep.
# ----------------------------------------------------------------------------
def prepare_inference_state(item_matrix: jax.Array, *, tn_target: int = 1024,
                            tk_target: int = 2048) -> dict:
    """One-time prep: pad the weight to the inference tiles and cast to bf16.

    The hot forward path never touches jnp.pad on the I×I weight again.
    """
    I = item_matrix.shape[0]
    tn = min(tn_target, _round_up(I, 128))
    tk = min(tk_target, _round_up(I, 128))
    Np, Kp = _round_up(I, tn), _round_up(I, tk)
    w = item_matrix.astype(jnp.bfloat16)
    if (Kp, Np) != (I, I):
        w = jnp.pad(w, ((0, Kp - I), (0, Np - I)))
    return {
        "item_matrix": item_matrix.astype(jnp.float32),  # f32 master (PyTorch buffer)
        "weights_bf16": w,                               # padded bf16 inference copy
        "num_items": I, "tn": tn, "tk": tk,
    }


def ease_fit(X: jax.Array, lambda_weight: float = 100.0,
             threshold: float = 0.0) -> dict:
    """Dense-JAX analogue of Model.forward(training=True).

    X: (num_users, num_items) dense 0/1 interaction matrix.
    # TODO(synk): the PyTorch path ingests a scipy CSR matrix; sparse formats
    # have no Pallas equivalent, so the dense interaction matrix is used.
    """
    num_items = X.shape[1]
    gram = pallas_gram(X)                                     # (I, I) float32

    if threshold > 0:
        gram = gram * (gram > threshold).astype(jnp.float32)
    gram = gram + lambda_weight * jnp.eye(num_items, dtype=jnp.float32)

    # TODO(synk): torch.linalg.inv has no Pallas equivalent; dense inverse in plain JAX.
    precision = jnp.linalg.inv(gram)
    item_matrix = precision / (-jnp.diag(precision))
    item_matrix = item_matrix * (1.0 - jnp.eye(num_items, dtype=jnp.float32))
    return prepare_inference_state(item_matrix.astype(jnp.float32))


# ----------------------------------------------------------------------------
# EASE inference forward: logits = einsum('bi,ij->bj', source, item_matrix)
# ----------------------------------------------------------------------------
def ease_forward(state: dict, source: jax.Array) -> dict:
    w = state["weights_bf16"]
    I = state["num_items"]
    tn, tk = state["tn"], state["tk"]
    Kp, Np = w.shape
    B = source.shape[0]
    assert source.shape[1] == I

    tm = min(256, _round_up(B, 16))          # bf16 sublane packing = 16
    Mp = _round_up(B, tm)
    src = source.astype(jnp.bfloat16)        # binary histories: exact in bf16
    if (Mp, Kp) != src.shape:
        src = jnp.pad(src, ((0, Mp - B), (0, Kp - I)))

    gm, gn, gk = Mp // tm, Np // tn, Kp // tk
    vmem = 2 * tm * tk * 2 + 3 * tk * tn * 2 + 2 * tm * tn * 4 + (4 << 20)

    if gm == 1:
        # Tiny-batch path: drop the size-1 M grid axis so megacore sharding
        # lands on the N axis; triple-buffer the weight stream (HBM-bound).
        out = pl.pallas_call(
            _make_matmul_kernel(k_axis=1),
            out_shape=jax.ShapeDtypeStruct((Mp, Np), jnp.float32),
            grid_spec=pltpu.PrefetchScalarGridSpec(
                num_scalar_prefetch=0,
                grid=(gn, gk),
                in_specs=[
                    pl.BlockSpec((tm, tk), lambda j, k: (0, k)),
                    pl.BlockSpec((tk, tn), lambda j, k: (k, j),
                                 pipeline_mode=pl.Buffered(3)),
                ],
                out_specs=pl.BlockSpec((tm, tn), lambda j, k: (0, j)),
            ),
            compiler_params=_compiler_params(("parallel", "arbitrary"), vmem),
        )(src, w)
    else:
        out = pl.pallas_call(
            _make_matmul_kernel(k_axis=2),
            out_shape=jax.ShapeDtypeStruct((Mp, Np), jnp.float32),
            grid_spec=pltpu.PrefetchScalarGridSpec(
                num_scalar_prefetch=0,
                grid=(gm, gn, gk),
                in_specs=[
                    pl.BlockSpec((tm, tk), lambda i, j, k: (i, k)),
                    pl.BlockSpec((tk, tn), lambda i, j, k: (k, j)),
                ],
                out_specs=pl.BlockSpec((tm, tn), lambda i, j, k: (i, j)),
            ),
            compiler_params=_compiler_params(
                ("parallel", "parallel", "arbitrary"), vmem),
        )(src, w)

    return {"logits": out[:B, :I]}


if __name__ == "__main__":
    key = jax.random.PRNGKey(0)
    k_x, k_src = jax.random.split(key)

    # Deliberately NOT multiples of 128 / 8-tiles to exercise the padding path.
    NUM_ITEMS = 200
    NUM_USERS = 60
    BATCH = 8

    # Deterministic synthetic binary interaction matrix (dense stand-in for the
    # CSR input of the PyTorch training branch).
    X = (jax.random.uniform(k_x, (NUM_USERS, NUM_ITEMS)) < 0.1).astype(jnp.float32)

    # Build the item matrix (the buffer in the PyTorch module) + inference prep.
    state = ease_fit(X, lambda_weight=100.0, threshold=0.0)
    jax.block_until_ready(state["weights_bf16"])

    # Deterministic eval-time batch of user histories.
    source = (jax.random.uniform(k_src, (BATCH, NUM_ITEMS)) < 0.1).astype(jnp.float32)

    out = ease_forward(state, source)
    logits = jax.block_until_ready(out["logits"])

    # ---------------- correctness checks against plain-JAX references --------
    gram_ref = X.T @ X                                  # integer co-occurrence counts
    gram_pal = jax.block_until_ready(pallas_gram(X))
    assert gram_pal.shape == (NUM_ITEMS, NUM_ITEMS)
    assert jnp.allclose(gram_pal, gram_ref, atol=1e-3, rtol=1e-3)

    # Reference logits with the same bf16 weights the kernel streams (exact up
    # to f32 summation order).
    w_ref = state["weights_bf16"][:NUM_ITEMS, :NUM_ITEMS].astype(jnp.float32)
    logits_ref = jnp.einsum("bi,ij->bj", source, w_ref)
    assert logits.shape == (BATCH, NUM_ITEMS)
    assert jnp.allclose(logits, logits_ref, atol=2e-3, rtol=2e-3)

    # And within bf16 weight-rounding of the f32 master item matrix.
    logits_f32 = jnp.einsum("bi,ij->bj", source, state["item_matrix"])
    assert jnp.allclose(logits, logits_f32, atol=5e-2, rtol=5e-2)

    print("KERNEL_OK")
</pallas_src>

<mosaic_0001>
module attributes {stable_mosaic.version = 11 : i64} {
  func.func @_gram_pair_kernel(%arg0: i32, %arg1: i32, %arg2: memref<1xi32, #tpu.memory_space<smem>>, %arg3: memref<1xi32, #tpu.memory_space<smem>>, %arg4: memref<256x128xbf16, #tpu.memory_space<vmem>>, %arg5: memref<128x256xbf16, #tpu.memory_space<vmem>>, %arg6: memref<256x256xf32, #tpu.memory_space<vmem>>) attributes {dimension_semantics = [#tpu.dimension_semantics<arbitrary>, #tpu.dimension_semantics<arbitrary>], iteration_bounds = array<i64: 1, 1>, scalar_prefetch = 2 : i64, scratch_operands = 0 : i64, tpu.core_type = #tpu.core_type<tc>, window_params = [{transform_indices = @transform_0, window_bounds = array<i64: 256, 128>}, {transform_indices = @transform_1, window_bounds = array<i64: 128, 256>}, {transform_indices = @transform_2, window_bounds = array<i64: 256, 256>}]} {
    %c0_i32 = arith.constant 0 : i32
    %0 = arith.cmpi eq, %arg1, %c0_i32 : i32
    %1 = arith.extui %0 : i1 to i32
    %c0_i32_0 = arith.constant 0 : i32
    %2 = arith.cmpi ne, %1, %c0_i32_0 : i32
    scf.if %2 {
      %cst_8 = arith.constant 0.000000e+00 : f32
      %9 = vector.broadcast %cst_8 : f32 to vector<256x256xf32>
      %c0_9 = arith.constant 0 : index
      %c0_10 = arith.constant 0 : index
      %10 = vector.load %arg6[%c0_9, %c0_10] : memref<256x256xf32, #tpu.memory_space<vmem>>, vector<256x256xf32>
      tpu.vector_store %arg6[%c0_9, %c0_10], %9 {strides = array<i32>} : memref<256x256xf32, #tpu.memory_space<vmem>>, vector<256x256xf32>,
    } else {
    }
    %c0 = arith.constant 0 : index
    %c0_1 = arith.constant 0 : index
    %3 = vector.load %arg6[%c0, %c0_1] : memref<256x256xf32, #tpu.memory_space<vmem>>, vector<256x256xf32>
    %c0_2 = arith.constant 0 : index
    %c0_3 = arith.constant 0 : index
    %4 = vector.load %arg4[%c0_2, %c0_3] : memref<256x128xbf16, #tpu.memory_space<vmem>>, vector<256x128xbf16>
    %c0_4 = arith.constant 0 : index
    %c0_5 = arith.constant 0 : index
    %5 = vector.load %arg5[%c0_4, %c0_5] : memref<128x256xbf16, #tpu.memory_space<vmem>>, vector<128x256xbf16>
    %cst = arith.constant dense<0.000000e+00> : vector<256x256xf32>
    %6 = tpu.matmul %4, %5, %cst {dimension_numbers = #tpu.dot_dimension_numbers<[1], [0], [0], [1], [0, 0, 1, 1], [], []>} : vector<256x128xbf16>, vector<128x256xbf16>, vector<256x256xf32> -> vector<256x256xf32>
    %7 = arith.addf %3, %6 : vector<256x256xf32>
    %c0_6 = arith.constant 0 : index
    %c0_7 = arith.constant 0 : index
    %8 = vector.load %arg6[%c0_6, %c0_7] : memref<256x256xf32, #tpu.memory_space<vmem>>, vector<256x256xf32>
    tpu.vector_store %arg6[%c0_6, %c0_7], %7 {strides = array<i32>} : memref<256x256xf32, #tpu.memory_space<vmem>>, vector<256x256xf32>,
    return
  }
  func.func @transform_0(%arg0: i32, %arg1: i32, %arg2: memref<1xi32, #tpu.memory_space<smem>>, %arg3: memref<1xi32, #tpu.memory_space<smem>>) -> (i32, i32) {
    %0 = arith.index_cast %arg0 : i32 to index
    %1 = memref.load %arg2[%0] : memref<1xi32, #tpu.memory_space<smem>>
    %c0_i32 = arith.constant 0 : i32
    return %1, %arg1 : i32, i32
  }
  func.func @transform_1(%arg0: i32, %arg1: i32, %arg2: memref<1xi32, #tpu.memory_space<smem>>, %arg3: memref<1xi32, #tpu.memory_space<smem>>) -> (i32, i32) {
    %0 = arith.index_cast %arg0 : i32 to index
    %1 = memref.load %arg3[%0] : memref<1xi32, #tpu.memory_space<smem>>
    %c0_i32 = arith.constant 0 : i32
    return %arg1, %1 : i32, i32
  }
  func.func @transform_2(%arg0: i32, %arg1: i32, %arg2: memref<1xi32, #tpu.memory_space<smem>>, %arg3: memref<1xi32, #tpu.memory_space<smem>>) -> (i32, i32) {
    %0 = arith.index_cast %arg0 : i32 to index
    %1 = memref.load %arg2[%0] : memref<1xi32, #tpu.memory_space<smem>>
    %2 = arith.index_cast %arg0 : i32 to index
    %3 = memref.load %arg3[%2] : memref<1xi32, #tpu.memory_space<smem>>
    %c0_i32 = arith.constant 0 : i32
    return %1, %3 : i32, i32
  }
}

</mosaic_0001>

<llo_original>
// kernel: tpu_custom_call.1
$region0: #{tpu_custom_call.1}
  #allocation0 [shape = 'u32[]', space=smem, size = 0x4, offset = 0x4, fixed_abs, tag = 'smem constant byte address 0x4 - core index']
  #allocation1 [shape = 'u32[144,128]{1,0:T(1,128)}', space=vmem, size = 0x12000, scoped, tag = 'internal scratch']
  #allocation2 [shape = 's32[1]{0}', space=sflag, size = 0x4, scoped, tag = 'scoped memory for tpu_custom_call.1']
  #allocation3 [shape = 's32[1]{0:T(128)S(6)}', space=smem, size = 0x200, scoped, tag = 'prefetched SMEM operand 0']
  #allocation4 [shape = 's32[1]{0:T(128)S(6)}', space=smem, size = 0x200, scoped, tag = 'prefetched SMEM operand 1']
  %s0 = inlined_call_operand.<no memory space> [shape: s32[1], index: 0, kind: input, shape index: {}]
  %s1 = inlined_call_operand.<no memory space> [shape: s32[1], index: 1, kind: input, shape index: {}]
  %s2 = inlined_call_operand.hbm [shape: bf16[256,128], index: 2, kind: input, shape index: {}]
  %s3 = inlined_call_operand.hbm [shape: bf16[128,256], index: 3, kind: input, shape index: {}]
  %s4 = inlined_call_operand.hbm [shape: f32[256,256], index: 4, kind: output, shape index: {}]
  %s5 = sld [smem:[#allocation0]]
  $region30: #{tpu_custom_call.1} parent=0
    _
  %s7 = ssub.s32 1, %s5
  %s8 = scalar_select 0, %s7, %s5
  %9 = sst [smem:[#allocation3]] %s0
  %10 = sst [smem:[#allocation4]] %s1
  $region1: #{tpu_custom_call.1} parent=0
    #allocation5 [shape = 'u8[65536]{0}', space=vmem, size = 0x10000, scoped, tag = 'input window, operand 2, single buffered']
    #allocation6 [shape = 's32[1]{0}', space=sflag, size = 0x4, scoped, tag = 'scoped memory for tpu_custom_call.1']
    #allocation7 [shape = 's32[1]{0}', space=sflag, size = 0x4, scoped, tag = 'scoped memory for tpu_custom_call.1']
    #allocation8 [shape = 'u8[65536]{0}', space=vmem, size = 0x10000, scoped, tag = 'input window, operand 3, single buffered']
    #allocation9 [shape = 's32[1]{0}', space=sflag, size = 0x4, scoped, tag = 'scoped memory for tpu_custom_call.1']
    #allocation10 [shape = 'u8[262144]{0}', space=vmem, size = 0x40000, scoped, tag = 'output window, operand 0, single buffered']
    %11 = vsyncpa [#allocation6], 0
    %12 = vsyncpa [#allocation9], 0
    %13 = vsyncpa [#allocation7], 0
    // Predicated region
    $region2: #{tpu_custom_call.1} parent=1 // pred_check
      _
    $region3: #{tpu_custom_call.1} parent=1 // pred_check_branch
      %15 = sbr.rel (0) target = $region5
    $region4: #{tpu_custom_call.1} parent=1 // pred_region
      %s16 = sld [smem:[#allocation3]]
      %s17 = smul.u32 32, %s16
      %s19 = ssub.s32 2048, 2048
      %20 = vsyncadd [#allocation6], %s19
      %s21 = smul.addr %s17, 64
      %s22 = scalar_lea.hbm %s2, %s21
      %s23 = sshll.u32 [#allocation5], 4
      %s24 = int_to_ptr.vmem [resolvable:$true] %s23
      %29 = dma.hbm_to_vmem [thread:$0]  %s22, 2048, %s24, [#allocation6], 64, 64, 4
    $region5: #{tpu_custom_call.1} parent=1 // pred_fallthru
      _
    // Predicated region
    $region6: #{tpu_custom_call.1} parent=1 // pred_check
      _
    $region7: #{tpu_custom_call.1} parent=1 // pred_check_branch
      %31 = sbr.rel (0) target = $region9
    $region8: #{tpu_custom_call.1} parent=1 // pred_region
      %s32 = sld [smem:[#allocation4]]
      %s33 = smul.u32 2, %s32
      %s35 = ssub.s32 2048, 2048
      %36 = vsyncadd [#allocation9], %s35
      %s37 = smul.addr %s33, 64
      %s38 = scalar_lea.hbm %s3, %s37
      %s39 = sshll.u32 [#allocation8], 4
      %s40 = int_to_ptr.vmem [resolvable:$true] %s39
      %45 = dma.hbm_to_vmem [thread:$0]  %s38, 2048, %s40, [#allocation9], 128, 128, 8
    $region9: #{tpu_custom_call.1} parent=1 // pred_fallthru
      _
    // Predicated region
    $region10: #{tpu_custom_call.1} parent=1 // pred_check
      _
    $region11: #{tpu_custom_call.1} parent=1 // pred_check_branch
      %47 = sbr.rel (0) target = $region13
    $region12: #{tpu_custom_call.1} parent=1 // pred_region
      %48 = dma.done [#allocation6], 2048
    $region13: #{tpu_custom_call.1} parent=1 // pred_fallthru
      _
    // Predicated region
    $region14: #{tpu_custom_call.1} parent=1 // pred_check
      _
    $region15: #{tpu_custom_call.1} parent=1 // pred_check_branch
      %50 = sbr.rel (0) target = $region17
    $region16: #{tpu_custom_call.1} parent=1 // pred_region
      %51 = dma.done [#allocation9], 2048
    $region17: #{tpu_custom_call.1} parent=1 // pred_fallthru
      _
    %s52 = sld [smem:[#allocation3]]
    %s53 = smul.u32 32, %s52
    %s54 = sld [smem:[#allocation4]]
    %s55 = smul.u32 2, %s54
    %s56 = sld [smem:[#allocation3]]
    %s57 = sld [smem:[#allocation4]]
    %s58 = smul.u32 32, %s56
    %s59 = smul.u32 2, %s57
    %p61 = scmp.eq.s32.totalorder 0, 0
    // Predicated region
    $region18: #{tpu_custom_call.1} parent=1 // pred_check
      %p62 = pneg %p61
    $region19: #{tpu_custom_call.1} parent=1 // pred_check_branch
      %64 = sbr.rel (%p62) target = $region21
    $region20: #{tpu_custom_call.1} parent=1 // pred_region
      %65 = vst [vmem:[#allocation10] sm:$0xff] 0.0
      %66 = vst [vmem:[#allocation10 + $0x8] sm:$0xff] 0.0
      %67 = vst [vmem:[#allocation10 + $0x10] sm:$0xff] 0.0
      %68 = vst [vmem:[#allocation10 + $0x18] sm:$0xff] 0.0
      %69 = vst [vmem:[#allocation10 + $0x20] sm:$0xff] 0.0
      %70 = vst [vmem:[#allocation10 + $0x28] sm:$0xff] 0.0
      %71 = vst [vmem:[#allocation10 + $0x30] sm:$0xff] 0.0
      %72 = vst [vmem:[#allocation10 + $0x38] sm:$0xff] 0.0
      %73 = vst [vmem:[#allocation10 + $0x40] sm:$0xff] 0.0
      %74 = vst [vmem:[#allocation10 + $0x48] sm:$0xff] 0.0
      %75 = vst [vmem:[#allocation10 + $0x50] sm:$0xff] 0.0
      %76 = vst [vmem:[#allocation10 + $0x58] sm:$0xff] 0.0
      %77 = vst [vmem:[#allocation10 + $0x60] sm:$0xff] 0.0
      %78 = vst [vmem:[#allocation10 + $0x68] sm:$0xff] 0.0
      %79 = vst [vmem:[#allocation10 + $0x70] sm:$0xff] 0.0
      %80 = vst [vmem:[#allocation10 + $0x78] sm:$0xff] 0.0
      %81 = vst [vmem:[#allocation10 + $0x80] sm:$0xff] 0.0
      %82 = vst [vmem:[#allocation10 + $0x88] sm:$0xff] 0.0
      %83 = vst [vmem:[#allocation10 + $0x90] sm:$0xff] 0.0
      %84 = vst [vmem:[#allocation10 + $0x98] sm:$0xff] 0.0
      %85 = vst [vmem:[#allocation10 + $0xa0] sm:$0xff] 0.0
      %86 = vst [vmem:[#allocation10 + $0xa8] sm:$0xff] 0.0
      %87 = vst [vmem:[#allocation10 + $0xb0] sm:$0xff] 0.0
      %88 = vst [vmem:[#allocation10 + $0xb8] sm:$0xff] 0.0
      %89 = vst [vmem:[#allocation10 + $0xc0] sm:$0xff] 0.0
      %90 = vst [vmem:[#allocation10 + $0xc8] sm:$0xff] 0.0
      %91 = vst [vmem:[#allocation10 + $0xd0] sm:$0xff] 0.0
      %92 = vst [vmem:[#allocation10 + $0xd8] sm:$0xff] 0.0
      %93 = vst [vmem:[#allocation10 + $0xe0] sm:$0xff] 0.0
      %94 = vst [vmem:[#allocation10 + $0xe8] sm:$0xff] 0.0
      %95 = vst [vmem:[#allocation10 + $0xf0] sm:$0xff] 0.0
      %96 = vst [vmem:[#allocation10 + $0xf8] sm:$0xff] 0.0
      %97 = vst [vmem:[#allocation10 + $0x100] sm:$0xff] 0.0
      %98 = vst [vmem:[#allocation10 + $0x108] sm:$0xff] 0.0
      %99 = vst [vmem:[#allocation10 + $0x110] sm:$0xff] 0.0
      %100 = vst [vmem:[#allocation10 + $0x118] sm:$0xff] 0.0
      %101 = vst [vmem:[#allocation10 + $0x120] sm:$0xff] 0.0
      %102 = vst [vmem:[#allocation10 + $0x128] sm:$0xff] 0.0
      %103 = vst [vmem:[#allocation10 + $0x130] sm:$0xff] 0.0
      %104 = vst [vmem:[#allocation10 + $0x138] sm:$0xff] 0.0
      %105 = vst [vmem:[#allocation10 + $0x140] sm:$0xff] 0.0
      %106 = vst [vmem:[#allocation10 + $0x148] sm:$0xff] 0.0
      %107 = vst [vmem:[#allocation10 + $0x150] sm:$0xff] 0.0
      %108 = vst [vmem:[#allocation10 + $0x158] sm:$0xff] 0.0
      %109 = vst [vmem:[#allocation10 + $0x160] sm:$0xff] 0.0
      %110 = vst [vmem:[#allocation10 + $0x168] sm:$0xff] 0.0
      %111 = vst [vmem:[#allocation10 + $0x170] sm:$0xff] 0.0
      %112 = vst [vmem:[#allocation10 + $0x178] sm:$0xff] 0.0
      %113 = vst [vmem:[#allocation10 + $0x180] sm:$0xff] 0.0
      %114 = vst [vmem:[#allocation10 + $0x188] sm:$0xff] 0.0
      %115 = vst [vmem:[#allocation10 + $0x190] sm:$0xff] 0.0
      %116 = vst [vmem:[#allocation10 + $0x198] sm:$0xff] 0.0
      %117 = vst [vmem:[#allocation10 + $0x1a0] sm:$0xff] 0.0
      %118 = vst [vmem:[#allocation10 + $0x1a8] sm:$0xff] 0.0
      %119 = vst [vmem:[#allocation10 + $0x1b0] sm:$0xff] 0.0
      %120 = vst [vmem:[#allocation10 + $0x1b8] sm:$0xff] 0.0
      %121 = vst [vmem:[#allocation10 + $0x1c0] sm:$0xff] 0.0
      %122 = vst [vmem:[#allocation10 + $0x1c8] sm:$0xff] 0.0
      %123 = vst [vmem:[#allocation10 + $0x1d0] sm:$0xff] 0.0
      %124 = vst [vmem:[#allocation10 + $0x1d8] sm:$0xff] 0.0
      %125 = vst [vmem:[#allocation10 + $0x1e0] sm:$0xff] 0.0
      %126 = vst [vmem:[#allocation10 + $0x1e8] sm:$0xff] 0.0
      %127 = vst [vmem:[#allocation10 + $0x1f0] sm:$0xff] 0.0
      %128 = vst [vmem:[#allocation10 + $0x1f8] sm:$0xff] 0.0
    $region21: #{tpu_custom_call.1} parent=1 // pred_fallthru
      _
    %v129 = vld [vmem:[#allocation10] sm:$0xff]
    %v130 = vld [vmem:[#allocation10 + $0x8] sm:$0xff]
    %v131 = vld [vmem:[#allocation10 + $0x10] sm:$0xff]
    %v132 = vld [vmem:[#allocation10 + $0x18] sm:$0xff]
    %v133 = vld [vmem:[#allocation10 + $0x20] sm:$0xff]
    %v134 = vld [vmem:[#allocation10 + $0x28] sm:$0xff]
    %v135 = vld [vmem:[#allocation10 + $0x30] sm:$0xff]
    %v136 = vld [vmem:[#allocation10 + $0x38] sm:$0xff]
    %v137 = vld [vmem:[#allocation10 + $0x40] sm:$0xff]
    %v138 = vld [vmem:[#allocation10 + $0x48] sm:$0xff]
    %v139 = vld [vmem:[#allocation10 + $0x50] sm:$0xff]
    %v140 = vld [vmem:[#allocation10 + $0x58] sm:$0xff]
    %v141 = vld [vmem:[#allocation10 + $0x60] sm:$0xff]
    %v142 = vld [vmem:[#allocation10 + $0x68] sm:$0xff]
    %v143 = vld [vmem:[#allocation10 + $0x70] sm:$0xff]
    %v144 = vld [vmem:[#allocation10 + $0x78] sm:$0xff]
    %v145 = vld [vmem:[#allocation10 + $0x80] sm:$0xff]
    %v146 = vld [vmem:[#allocation10 + $0x88] sm:$0xff]
    %v147 = vld [vmem:[#allocation10 + $0x90] sm:$0xff]
    %v148 = vld [vmem:[#allocation10 + $0x98] sm:$0xff]
    %v149 = vld [vmem:[#allocation10 + $0xa0] sm:$0xff]
    %v150 = vld [vmem:[#allocation10 + $0xa8] sm:$0xff]
    %v151 = vld [vmem:[#allocation10 + $0xb0] sm:$0xff]
    %v152 = vld [vmem:[#allocation10 + $0xb8] sm:$0xff]
    %v153 = vld [vmem:[#allocation10 + $0xc0] sm:$0xff]
    %v154 = vld [vmem:[#allocation10 + $0xc8] sm:$0xff]
    %v155 = vld [vmem:[#allocation10 + $0xd0] sm:$0xff]
    %v156 = vld [vmem:[#allocation10 + $0xd8] sm:$0xff]
    %v157 = vld [vmem:[#allocation10 + $0xe0] sm:$0xff]
    %v158 = vld [vmem:[#allocation10 + $0xe8] sm:$0xff]
    %v159 = vld [vmem:[#allocation10 + $0xf0] sm:$0xff]
    %v160 = vld [vmem:[#allocation10 + $0xf8] sm:$0xff]
    %v161 = vld [vmem:[#allocation10 + $0x100] sm:$0xff]
    %v162 = vld [vmem:[#allocation10 + $0x108] sm:$0xff]
    %v163 = vld [vmem:[#allocation10 + $0x110] sm:$0xff]
    %v164 = vld [vmem:[#allocation10 + $0x118] sm:$0xff]
    %v165 = vld [vmem:[#allocation10 + $0x120] sm:$0xff]
    %v166 = vld [vmem:[#allocation10 + $0x128] sm:$0xff]
    %v167 = vld [vmem:[#allocation10 + $0x130] sm:$0xff]
    %v168 = vld [vmem:[#allocation10 + $0x138] sm:$0xff]
    %v169 = vld [vmem:[#allocation10 + $0x140] sm:$0xff]
    %v170 = vld [vmem:[#allocation10 + $0x148] sm:$0xff]
    %v171 = vld [vmem:[#allocation10 + $0x150] sm:$0xff]
    %v172 = vld [vmem:[#allocation10 + $0x158] sm:$0xff]
    %v173 = vld [vmem:[#allocation10 + $0x160] sm:$0xff]
    %v174 = vld [vmem:[#allocation10 + $0x168] sm:$0xff]
    %v175 = vld [vmem:[#allocation10 + $0x170] sm:$0xff]
    %v176 = vld [vmem:[#allocation10 + $0x178] sm:$0xff]
    %v177 = vld [vmem:[#allocation10 + $0x180] sm:$0xff]
    %v178 = vld [vmem:[#allocation10 + $0x188] sm:$0xff]
    %v179 = vld [vmem:[#allocation10 + $0x190] sm:$0xff]
    %v180 = vld [vmem:[#allocation10 + $0x198] sm:$0xff]
    %v181 = vld [vmem:[#allocation10 + $0x1a0] sm:$0xff]
    %v182 = vld [vmem:[#allocation10 + $0x1a8] sm:$0xff]
    %v183 = vld [vmem:[#allocation10 + $0x1b0] sm:$0xff]
    %v184 = vld [vmem:[#allocation10 + $0x1b8] sm:$0xff]
    %v185 = vld [vmem:[#allocation10 + $0x1c0] sm:$0xff]
    %v186 = vld [vmem:[#allocation10 + $0x1c8] sm:$0xff]
    %v187 = vld [vmem:[#allocation10 + $0x1d0] sm:$0xff]
    %v188 = vld [vmem:[#allocation10 + $0x1d8] sm:$0xff]
    %v189 = vld [vmem:[#allocation10 + $0x1e0] sm:$0xff]
    %v190 = vld [vmem:[#allocation10 + $0x1e8] sm:$0xff]
    %v191 = vld [vmem:[#allocation10 + $0x1f0] sm:$0xff]
    %v192 = vld [vmem:[#allocation10 + $0x1f8] sm:$0xff]
    %v193 = vld [vmem:[#allocation5] sm:$0xf]
    %v194 = vld [vmem:[#allocation5 + $0x4] sm:$0xf]
    %v195 = vld [vmem:[#allocation5 + $0x8] sm:$0xf]
    %v196 = vld [vmem:[#allocation5 + $0xc] sm:$0xf]
    %v197 = vld [vmem:[#allocation5 + $0x10] sm:$0xf]
    %v198 = vld [vmem:[#allocation5 + $0x14] sm:$0xf]
    %v199 = vld [vmem:[#allocation5 + $0x18] sm:$0xf]
    %v200 = vld [vmem:[#allocation5 + $0x1c] sm:$0xf]
    %v201 = vld [vmem:[#allocation5 + $0x20] sm:$0xf]
    %v202 = vld [vmem:[#allocation5 + $0x24] sm:$0xf]
    %v203 = vld [vmem:[#allocation5 + $0x28] sm:$0xf]
    %v204 = vld [vmem:[#allocation5 + $0x2c] sm:$0xf]
    %v205 = vld [vmem:[#allocation5 + $0x30] sm:$0xf]
    %v206 = vld [vmem:[#allocation5 + $0x34] sm:$0xf]
    %v207 = vld [vmem:[#allocation5 + $0x38] sm:$0xf]
    %v208 = vld [vmem:[#allocation5 + $0x3c] sm:$0xf]
    %v209 = vld [vmem:[#allocation5 + $0x40] sm:$0xf]
    %v210 = vld [vmem:[#allocation5 + $0x44] sm:$0xf]
    %v211 = vld [vmem:[#allocation5 + $0x48] sm:$0xf]
    %v212 = vld [vmem:[#allocation5 + $0x4c] sm:$0xf]
    %v213 = vld [vmem:[#allocation5 + $0x50] sm:$0xf]
    %v214 = vld [vmem:[#allocation5 + $0x54] sm:$0xf]
    %v215 = vld [vmem:[#allocation5 + $0x58] sm:$0xf]
    %v216 = vld [vmem:[#allocation5 + $0x5c] sm:$0xf]
    %v217 = vld [vmem:[#allocation5 + $0x60] sm:$0xf]
    %v218 = vld [vmem:[#allocation5 + $0x64] sm:$0xf]
    %v219 = vld [vmem:[#allocation5 + $0x68] sm:$0xf]
    %v220 = vld [vmem:[#allocation5 + $0x6c] sm:$0xf]
    %v221 = vld [vmem:[#allocation5 + $0x70] sm:$0xf]
    %v222 = vld [vmem:[#allocation5 + $0x74] sm:$0xf]
    %v223 = vld [vmem:[#allocation5 + $0x78] sm:$0xf]
    %v224 = vld [vmem:[#allocation5 + $0x7c] sm:$0xf]
    %v225 = vld [vmem:[#allocation8] sm:$0xff]
    %v226 = vld [vmem:[#allocation8 + $0x8] sm:$0xff]
    %v227 = vld [vmem:[#allocation8 + $0x10] sm:$0xff]
    %v228 = vld [vmem:[#allocation8 + $0x18] sm:$0xff]
    %v229 = vld [vmem:[#allocation8 + $0x20] sm:$0xff]
    %v230 = vld [vmem:[#allocation8 + $0x28] sm:$0xff]
    %v231 = vld [vmem:[#allocation8 + $0x30] sm:$0xff]
    %v232 = vld [vmem:[#allocation8 + $0x38] sm:$0xff]
    %v233 = vld [vmem:[#allocation8 + $0x40] sm:$0xff]
    %v234 = vld [vmem:[#allocation8 + $0x48] sm:$0xff]
    %v235 = vld [vmem:[#allocation8 + $0x50] sm:$0xff]
    %v236 = vld [vmem:[#allocation8 + $0x58] sm:$0xff]
    %v237 = vld [vmem:[#allocation8 + $0x60] sm:$0xff]
    %v238 = vld [vmem:[#allocation8 + $0x68] sm:$0xff]
    %v239 = vld [vmem:[#allocation8 + $0x70] sm:$0xff]
    %v240 = vld [vmem:[#allocation8 + $0x78] sm:$0xff]
    %v273 = vunpack.c.l.b16 %v193
    %v274 = vunpack.c.l.b16 %v194
    %v275 = vunpack.c.l.b16 %v195
    %v276 = vunpack.c.l.b16 %v196
    %v277 = vunpack.c.l.b16 %v197
    %v278 = vunpack.c.l.b16 %v198
    %v279 = vunpack.c.l.b16 %v199
    %v280 = vunpack.c.l.b16 %v200
    %v281 = vunpack.c.l.b16 %v201
    %v282 = vunpack.c.l.b16 %v202
    %v283 = vunpack.c.l.b16 %v203
    %v284 = vunpack.c.l.b16 %v204
    %v285 = vunpack.c.l.b16 %v205
    %v286 = vunpack.c.l.b16 %v206
    %v287 = vunpack.c.l.b16 %v207
    %v288 = vunpack.c.l.b16 %v208
    %v289 = vunpack.c.l.b16 %v209
    %v290 = vunpack.c.l.b16 %v210
    %v291 = vunpack.c.l.b16 %v211
    %v292 = vunpack.c.l.b16 %v212
    %v293 = vunpack.c.l.b16 %v213
    %v294 = vunpack.c.l.b16 %v214
    %v295 = vunpack.c.l.b16 %v215
    %v296 = vunpack.c.l.b16 %v216
    %v297 = vunpack.c.l.b16 %v217
    %v298 = vunpack.c.l.b16 %v218
    %v299 = vunpack.c.l.b16 %v219
    %v300 = vunpack.c.l.b16 %v220
    %v301 = vunpack.c.l.b16 %v221
    %v302 = vunpack.c.l.b16 %v222
    %v303 = vunpack.c.l.b16 %v223
    %v304 = vunpack.c.l.b16 %v224
    %v305 = vpack.c.b16 %v274, %v273
    %v306 = vpack.c.b16 %v276, %v275
    %v307 = vpack.c.b16 %v278, %v277
    %v308 = vpack.c.b16 %v280, %v279
    %v309 = vpack.c.b16 %v282, %v281
    %v310 = vpack.c.b16 %v284, %v283
    %v311 = vpack.c.b16 %v286, %v285
    %v312 = vpack.c.b16 %v288, %v287
    %v313 = vpack.c.b16 %v290, %v289
    %v314 = vpack.c.b16 %v292, %v291
    %v315 = vpack.c.b16 %v294, %v293
    %v316 = vpack.c.b16 %v296, %v295
    %v317 = vpack.c.b16 %v298, %v297
    %v318 = vpack.c.b16 %v300, %v299
    %v319 = vpack.c.b16 %v302, %v301
    %v320 = vpack.c.b16 %v304, %v303
    %v353 = vunpack.c.l.b16 %v225
    %v354 = vunpack.c.h.b16 %v225
    %v355 = vunpack.c.l.b16 %v226
    %v356 = vunpack.c.h.b16 %v226
    %v357 = vunpack.c.l.b16 %v227
    %v358 = vunpack.c.h.b16 %v227
    %v359 = vunpack.c.l.b16 %v228
    %v360 = vunpack.c.h.b16 %v228
    %v361 = vunpack.c.l.b16 %v229
    %v362 = vunpack.c.h.b16 %v229
    %v363 = vunpack.c.l.b16 %v230
    %v364 = vunpack.c.h.b16 %v230
    %v365 = vunpack.c.l.b16 %v231
    %v366 = vunpack.c.h.b16 %v231
    %v367 = vunpack.c.l.b16 %v232
    %v368 = vunpack.c.h.b16 %v232
    %v369 = vunpack.c.l.b16 %v233
    %v370 = vunpack.c.h.b16 %v233
    %v371 = vunpack.c.l.b16 %v234
    %v372 = vunpack.c.h.b16 %v234
    %v373 = vunpack.c.l.b16 %v235
    %v374 = vunpack.c.h.b16 %v235
    %v375 = vunpack.c.l.b16 %v236
    %v376 = vunpack.c.h.b16 %v236
    %v377 = vunpack.c.l.b16 %v237
    %v378 = vunpack.c.h.b16 %v237
    %v379 = vunpack.c.l.b16 %v238
    %v380 = vunpack.c.h.b16 %v238
    %v381 = vunpack.c.l.b16 %v239
    %v382 = vunpack.c.h.b16 %v239
    %v383 = vunpack.c.l.b16 %v240
    %v384 = vunpack.c.h.b16 %v240
    %v385 = vpack.c.b16 %v355, %v353
    %v386 = vpack.c.b16 %v356, %v354
    %v387 = vpack.c.b16 %v359, %v357
    %v388 = vpack.c.b16 %v360, %v358
    %v389 = vpack.c.b16 %v363, %v361
    %v390 = vpack.c.b16 %v364, %v362
    %v391 = vpack.c.b16 %v367, %v365
    %v392 = vpack.c.b16 %v368, %v366
    %v393 = vpack.c.b16 %v371, %v369
    %v394 = vpack.c.b16 %v372, %v370
    %v395 = vpack.c.b16 %v375, %v373
    %v396 = vpack.c.b16 %v376, %v374
    %v397 = vpack.c.b16 %v379, %v377
    %v398 = vpack.c.b16 %v380, %v378
    %v399 = vpack.c.b16 %v383, %v381
    %v400 = vpack.c.b16 %v384, %v382
    %417 = vmatprep.subr.bf16.mxu0 %v386
    %418 = vmatpush1.bf16.msra.mxu0 %v385
    %419 = vmatprep.subr.bf16.mxu0 %v388
    %420 = vmatpush1.bf16.msra.mxu0 %v387
    %421 = vmatprep.subr.bf16.mxu0 %v390
    %422 = vmatpush1.bf16.msra.mxu0 %v389
    %423 = vmatprep.subr.bf16.mxu0 %v392
    %424 = vmatpush1.bf16.msra.mxu0 %v391
    %425 = vmatprep.subr.bf16.mxu0 %v394
    %426 = vmatpush1.bf16.msra.mxu0 %v393
    %427 = vmatprep.subr.bf16.mxu0 %v396
    %428 = vmatpush1.bf16.msra.mxu0 %v395
    %429 = vmatprep.subr.bf16.mxu0 %v398
    %430 = vmatpush1.bf16.msra.mxu0 %v397
    %431 = vmatprep.subr.bf16.mxu0 %v400
    %432 = vmatpush1.bf16.msra.mxu0 %v399
    %433 = vmatprep.subr.bf16.mxu0 0
    %434 = vmatpush1.bf16.msra.mxu0 0
    %435 = vmatprep.subr.bf16.mxu0 0
    %436 = vmatpush1.bf16.msra.mxu0 0
    %437 = vmatprep.subr.bf16.mxu0 0
    %438 = vmatpush1.bf16.msra.mxu0 0
    %439 = vmatprep.subr.bf16.mxu0 0
    %440 = vmatpush1.bf16.msra.mxu0 0
    %441 = vmatprep.subr.bf16.mxu0 0
    %442 = vmatpush1.bf16.msra.mxu0 0
    %443 = vmatprep.subr.bf16.mxu0 0
    %444 = vmatpush1.bf16.msra.mxu0 0
    %445 = vmatprep.subr.bf16.mxu0 0
    %446 = vmatpush1.bf16.msra.mxu0 0
    %447 = vmatprep.subr.bf16.mxu0 0
    %448 = vmatpush1.bf16.msra.mxu0 0
    %449 = vmatprep.mubr.bf16.mxu0 0
    %450 = vmatmul.mubr.bf16.gmra.mrb[0].mxu0 %v305
    %v451 = vpop.f32.mrb[0].mxu0
    %v452 = vadd.f32 0.0, %v451
    %v453 = vpop.f32.mrb[0].mxu0
    %v454 = vadd.f32 0.0, %v453
    %v455 = vpop.f32.mrb[0].mxu0
    %v456 = vadd.f32 0.0, %v455
    %v457 = vpop.f32.mrb[0].mxu0
    %v458 = vadd.f32 0.0, %v457
    %459 = vmatprep.mubr.bf16.mxu0 0
    %460 = vmatmul.mubr.bf16.gmra.mrb[0].mxu0 %v306
    %v461 = vpop.f32.mrb[0].mxu0
    %v462 = vadd.f32 0.0, %v461
    %v463 = vpop.f32.mrb[0].mxu0
    %v464 = vadd.f32 0.0, %v463
    %v465 = vpop.f32.mrb[0].mxu0
    %v466 = vadd.f32 0.0, %v465
    %v467 = vpop.f32.mrb[0].mxu0
    %v468 = vadd.f32 0.0, %v467
    %469 = vmatprep.mubr.bf16.mxu0 0
    %470 = vmatmul.mubr.bf16.gmra.mrb[0].mxu0 %v307
    %v471 = vpop.f32.mrb[0].mxu0
    %v472 = vadd.f32 0.0, %v471
    %v473 = vpop.f32.mrb[0].mxu0
    %v474 = vadd.f32 0.0, %v473
    %v475 = vpop.f32.mrb[0].mxu0
    %v476 = vadd.f32 0.0, %v475
    %v477 = vpop.f32.mrb[0].mxu0
    %v478 = vadd.f32 0.0, %v477
    %479 = vmatprep.mubr.bf16.mxu0 0
    %480 = vmatmul.mubr.bf16.gmra.mrb[0].mxu0 %v308
    %v481 = vpop.f32.mrb[0].mxu0
    %v482 = vadd.f32 0.0, %v481
    %v483 = vpop.f32.mrb[0].mxu0
    %v484 = vadd.f32 0.0, %v483
    %v485 = vpop.f32.mrb[0].mxu0
    %v486 = vadd.f32 0.0, %v485
    %v487 = vpop.f32.mrb[0].mxu0
    %v488 = vadd.f32 0.0, %v487
    %489 = vmatprep.mubr.bf16.mxu0 0
    %490 = vmatmul.mubr.bf16.gmra.mrb[0].mxu0 %v309
    %v491 = vpop.f32.mrb[0].mxu0
    %v492 = vadd.f32 0.0, %v491
    %v493 = vpop.f32.mrb[0].mxu0
    %v494 = vadd.f32 0.0, %v493
    %v495 = vpop.f32.mrb[0].mxu0
    %v496 = vadd.f32 0.0, %v495
    %v497 = vpop.f32.mrb[0].mxu0
    %v498 = vadd.f32 0.0, %v497
    %499 = vmatprep.mubr.bf16.mxu0 0
    %500 = vmatmul.mubr.bf16.gmra.mrb[0].mxu0 %v310
    %v501 = vpop.f32.mrb[0].mxu0
    %v502 = vadd.f32 0.0, %v501
    %v503 = vpop.f32.mrb[0].mxu0
    %v504 = vadd.f32 0.0, %v503
    %v505 = vpop.f32.mrb[0].mxu0
    %v506 = vadd.f32 0.0, %v505
    %v507 = vpop.f32.mrb[0].mxu0
    %v508 = vadd.f32 0.0, %v507
    %509 = vmatprep.mubr.bf16.mxu0 0
    %510 = vmatmul.mubr.bf16.gmra.mrb[0].mxu0 %v311
    %v511 = vpop.f32.mrb[0].mxu0
    %v512 = vadd.f32 0.0, %v511
    %v513 = vpop.f32.mrb[0].mxu0
    %v514 = vadd.f32 0.0, %v513
    %v515 = vpop.f32.mrb[0].mxu0
    %v516 = vadd.f32 0.0, %v515
    %v517 = vpop.f32.mrb[0].mxu0
    %v518 = vadd.f32 0.0, %v517
    %519 = vmatprep.mubr.bf16.mxu0 0
    %520 = vmatmul.mubr.bf16.gmra.mrb[0].mxu0 %v312
    %v521 = vpop.f32.mrb[0].mxu0
    %v522 = vadd.f32 0.0, %v521
    %v523 = vpop.f32.mrb[0].mxu0
    %v524 = vadd.f32 0.0, %v523
    %v525 = vpop.f32.mrb[0].mxu0
    %v526 = vadd.f32 0.0, %v525
    %v527 = vpop.f32.mrb[0].mxu0
    %v528 = vadd.f32 0.0, %v527
    %529 = vmatprep.mubr.bf16.mxu0 0
    %530 = vmatmul.mubr.bf16.gmra.mrb[0].mxu0 %v313
    %v531 = vpop.f32.mrb[0].mxu0
    %v532 = vadd.f32 0.0, %v531
    %v533 = vpop.f32.mrb[0].mxu0
    %v534 = vadd.f32 0.0, %v533
    %v535 = vpop.f32.mrb[0].mxu0
    %v536 = vadd.f32 0.0, %v535
    %v537 = vpop.f32.mrb[0].mxu0
    %v538 = vadd.f32 0.0, %v537
    %539 = vmatprep.mubr.bf16.mxu0 0
    %540 = vmatmul.mubr.bf16.gmra.mrb[0].mxu0 %v314
    %v541 = vpop.f32.mrb[0].mxu0
    %v542 = vadd.f32 0.0, %v541
    %v543 = vpop.f32.mrb[0].mxu0
    %v544 = vadd.f32 0.0, %v543
    %v545 = vpop.f32.mrb[0].mxu0
    %v546 = vadd.f32 0.0, %v545
    %v547 = vpop.f32.mrb[0].mxu0
    %v548 = vadd.f32 0.0, %v547
    %549 = vmatprep.mubr.bf16.mxu0 0
    %550 = vmatmul.mubr.bf16.gmra.mrb[0].mxu0 %v315
    %v551 = vpop.f32.mrb[0].mxu0
    %v552 = vadd.f32 0.0, %v551
    %v553 = vpop.f32.mrb[0].mxu0
    %v554 = vadd.f32 0.0, %v553
    %v555 = vpop.f32.mrb[0].mxu0
    %v556 = vadd.f32 0.0, %v555
    %v557 = vpop.f32.mrb[0].mxu0
    %v558 = vadd.f32 0.0, %v557
    %559 = vmatprep.mubr.bf16.mxu0 0
    %560 = vmatmul.mubr.bf16.gmra.mrb[0].mxu0 %v316
    %v561 = vpop.f32.mrb[0].mxu0
    %v562 = vadd.f32 0.0, %v561
    %v563 = vpop.f32.mrb[0].mxu0
    %v564 = vadd.f32 0.0, %v563
    %v565 = vpop.f32.mrb[0].mxu0
    %v566 = vadd.f32 0.0, %v565
    %v567 = vpop.f32.mrb[0].mxu0
    %v568 = vadd.f32 0.0, %v567
    %569 = vmatprep.mubr.bf16.mxu0 0
    %570 = vmatmul.mubr.bf16.gmra.mrb[0].mxu0 %v317
    %v571 = vpop.f32.mrb[0].mxu0
    %v572 = vadd.f32 0.0, %v571
    %v573 = vpop.f32.mrb[0].mxu0
    %v574 = vadd.f32 0.0, %v573
    %v575 = vpop.f32.mrb[0].mxu0
    %v576 = vadd.f32 0.0, %v575
    %v577 = vpop.f32.mrb[0].mxu0
    %v578 = vadd.f32 0.0, %v577
    %579 = vmatprep.mubr.bf16.mxu0 0
    %580 = vmatmul.mubr.bf16.gmra.mrb[0].mxu0 %v318
    %v581 = vpop.f32.mrb[0].mxu0
    %v582 = vadd.f32 0.0, %v581
    %v583 = vpop.f32.mrb[0].mxu0
    %v584 = vadd.f32 0.0, %v583
    %v585 = vpop.f32.mrb[0].mxu0
    %v586 = vadd.f32 0.0, %v585
    %v587 = vpop.f32.mrb[0].mxu0
    %v588 = vadd.f32 0.0, %v587
    %589 = vmatprep.mubr.bf16.mxu0 0
    %590 = vmatmul.mubr.bf16.gmra.mrb[0].mxu0 %v319
    %v591 = vpop.f32.mrb[0].mxu0
    %v592 = vadd.f32 0.0, %v591
    %v593 = vpop.f32.mrb[0].mxu0
    %v594 = vadd.f32 0.0, %v593
    %v595 = vpop.f32.mrb[0].mxu0
    %v596 = vadd.f32 0.0, %v595
    %v597 = vpop.f32.mrb[0].mxu0
    %v598 = vadd.f32 0.0, %v597
    %599 = vmatprep.mubr.bf16.mxu0 0
    %600 = vmatmul.mubr.bf16.gmra.mrb[0].mxu0 %v320
    %v601 = vpop.f32.mrb[0].mxu0
    %v602 = vadd.f32 0.0, %v601
    %v603 = vpop.f32.mrb[0].mxu0
    %v604 = vadd.f32 0.0, %v603
    %v605 = vpop.f32.mrb[0].mxu0
    %v606 = vadd.f32 0.0, %v605
    %v607 = vpop.f32.mrb[0].mxu0
    %v608 = vadd.f32 0.0, %v607
    %609 = vdwg.mxu0
    %v610 = vadd.f32 %v129, %v452
    %v611 = vadd.f32 %v130, %v454
    %v612 = vadd.f32 %v131, %v456
    %v613 = vadd.f32 %v132, %v458
    %v614 = vadd.f32 %v133, %v462
    %v615 = vadd.f32 %v134, %v464
    %v616 = vadd.f32 %v135, %v466
    %v617 = vadd.f32 %v136, %v468
    %v618 = vadd.f32 %v137, %v472
    %v619 = vadd.f32 %v138, %v474
    %v620 = vadd.f32 %v139, %v476
    %v621 = vadd.f32 %v140, %v478
    %v622 = vadd.f32 %v141, %v482
    %v623 = vadd.f32 %v142, %v484
    %v624 = vadd.f32 %v143, %v486
    %v625 = vadd.f32 %v144, %v488
    %v626 = vadd.f32 %v145, %v492
    %v627 = vadd.f32 %v146, %v494
    %v628 = vadd.f32 %v147, %v496
    %v629 = vadd.f32 %v148, %v498
    %v630 = vadd.f32 %v149, %v502
    %v631 = vadd.f32 %v150, %v504
    %v632 = vadd.f32 %v151, %v506
    %v633 = vadd.f32 %v152, %v508
    %v634 = vadd.f32 %v153, %v512
    %v635 = vadd.f32 %v154, %v514
    %v636 = vadd.f32 %v155, %v516
    %v637 = vadd.f32 %v156, %v518
    %v638 = vadd.f32 %v157, %v522
    %v639 = vadd.f32 %v158, %v524
    %v640 = vadd.f32 %v159, %v526
    %v641 = vadd.f32 %v160, %v528
    %v642 = vadd.f32 %v161, %v532
    %v643 = vadd.f32 %v162, %v534
    %v644 = vadd.f32 %v163, %v536
    %v645 = vadd.f32 %v164, %v538
    %v646 = vadd.f32 %v165, %v542
    %v647 = vadd.f32 %v166, %v544
    %v648 = vadd.f32 %v167, %v546
    %v649 = vadd.f32 %v168, %v548
    %v650 = vadd.f32 %v169, %v552
    %v651 = vadd.f32 %v170, %v554
    %v652 = vadd.f32 %v171, %v556
    %v653 = vadd.f32 %v172, %v558
    %v654 = vadd.f32 %v173, %v562
    %v655 = vadd.f32 %v174, %v564
    %v656 = vadd.f32 %v175, %v566
    %v657 = vadd.f32 %v176, %v568
    %v658 = vadd.f32 %v177, %v572
    %v659 = vadd.f32 %v178, %v574
    %v660 = vadd.f32 %v179, %v576
    %v661 = vadd.f32 %v180, %v578
    %v662 = vadd.f32 %v181, %v582
    %v663 = vadd.f32 %v182, %v584
    %v664 = vadd.f32 %v183, %v586
    %v665 = vadd.f32 %v184, %v588
    %v666 = vadd.f32 %v185, %v592
    %v667 = vadd.f32 %v186, %v594
    %v668 = vadd.f32 %v187, %v596
    %v669 = vadd.f32 %v188, %v598
    %v670 = vadd.f32 %v189, %v602
    %v671 = vadd.f32 %v190, %v604
    %v672 = vadd.f32 %v191, %v606
    %v673 = vadd.f32 %v192, %v608
    %674 = vst [vmem:[#allocation10] sm:$0xff] %v610
    %675 = vst [vmem:[#allocation10 + $0x8] sm:$0xff] %v611
    %676 = vst [vmem:[#allocation10 + $0x10] sm:$0xff] %v612
    %677 = vst [vmem:[#allocation10 + $0x18] sm:$0xff] %v613
    %678 = vst [vmem:[#allocation10 + $0x20] sm:$0xff] %v614
    %679 = vst [vmem:[#allocation10 + $0x28] sm:$0xff] %v615
    %680 = vst [vmem:[#allocation10 + $0x30] sm:$0xff] %v616
    %681 = vst [vmem:[#allocation10 + $0x38] sm:$0xff] %v617
    %682 = vst [vmem:[#allocation10 + $0x40] sm:$0xff] %v618
    %683 = vst [vmem:[#allocation10 + $0x48] sm:$0xff] %v619
    %684 = vst [vmem:[#allocation10 + $0x50] sm:$0xff] %v620
    %685 = vst [vmem:[#allocation10 + $0x58] sm:$0xff] %v621
    %686 = vst [vmem:[#allocation10 + $0x60] sm:$0xff] %v622
    %687 = vst [vmem:[#allocation10 + $0x68] sm:$0xff] %v623
    %688 = vst [vmem:[#allocation10 + $0x70] sm:$0xff] %v624
    %689 = vst [vmem:[#allocation10 + $0x78] sm:$0xff] %v625
    %690 = vst [vmem:[#allocation10 + $0x80] sm:$0xff] %v626
    %691 = vst [vmem:[#allocation10 + $0x88] sm:$0xff] %v627
    %692 = vst [vmem:[#allocation10 + $0x90] sm:$0xff] %v628
    %693 = vst [vmem:[#allocation10 + $0x98] sm:$0xff] %v629
    %694 = vst [vmem:[#allocation10 + $0xa0] sm:$0xff] %v630
    %695 = vst [vmem:[#allocation10 + $0xa8] sm:$0xff] %v631
    %696 = vst [vmem:[#allocation10 + $0xb0] sm:$0xff] %v632
    %697 = vst [vmem:[#allocation10 + $0xb8] sm:$0xff] %v633
    %698 = vst [vmem:[#allocation10 + $0xc0] sm:$0xff] %v634
    %699 = vst [vmem:[#allocation10 + $0xc8] sm:$0xff] %v635
    %700 = vst [vmem:[#allocation10 + $0xd0] sm:$0xff] %v636
    %701 = vst [vmem:[#allocation10 + $0xd8] sm:$0xff] %v637
    %702 = vst [vmem:[#allocation10 + $0xe0] sm:$0xff] %v638
    %703 = vst [vmem:[#allocation10 + $0xe8] sm:$0xff] %v639
    %704 = vst [vmem:[#allocation10 + $0xf0] sm:$0xff] %v640
    %705 = vst [vmem:[#allocation10 + $0xf8] sm:$0xff] %v641
    %706 = vst [vmem:[#allocation10 + $0x100] sm:$0xff] %v642
    %707 = vst [vmem:[#allocation10 + $0x108] sm:$0xff] %v643
    %708 = vst [vmem:[#allocation10 + $0x110] sm:$0xff] %v644
    %709 = vst [vmem:[#allocation10 + $0x118] sm:$0xff] %v645
    %710 = vst [vmem:[#allocation10 + $0x120] sm:$0xff] %v646
    %711 = vst [vmem:[#allocation10 + $0x128] sm:$0xff] %v647
    %712 = vst [vmem:[#allocation10 + $0x130] sm:$0xff] %v648
    %713 = vst [vmem:[#allocation10 + $0x138] sm:$0xff] %v649
    %714 = vst [vmem:[#allocation10 + $0x140] sm:$0xff] %v650
    %715 = vst [vmem:[#allocation10 + $0x148] sm:$0xff] %v651
    %716 = vst [vmem:[#allocation10 + $0x150] sm:$0xff] %v652
    %717 = vst [vmem:[#allocation10 + $0x158] sm:$0xff] %v653
    %718 = vst [vmem:[#allocation10 + $0x160] sm:$0xff] %v654
    %719 = vst [vmem:[#allocation10 + $0x168] sm:$0xff] %v655
    %720 = vst [vmem:[#allocation10 + $0x170] sm:$0xff] %v656
    %721 = vst [vmem:[#allocation10 + $0x178] sm:$0xff] %v657
    %722 = vst [vmem:[#allocation10 + $0x180] sm:$0xff] %v658
    %723 = vst [vmem:[#allocation10 + $0x188] sm:$0xff] %v659
    %724 = vst [vmem:[#allocation10 + $0x190] sm:$0xff] %v660
    %725 = vst [vmem:[#allocation10 + $0x198] sm:$0xff] %v661
    %726 = vst [vmem:[#allocation10 + $0x1a0] sm:$0xff] %v662
    %727 = vst [vmem:[#allocation10 + $0x1a8] sm:$0xff] %v663
    %728 = vst [vmem:[#allocation10 + $0x1b0] sm:$0xff] %v664
    %729 = vst [vmem:[#allocation10 + $0x1b8] sm:$0xff] %v665
    %730 = vst [vmem:[#allocation10 + $0x1c0] sm:$0xff] %v666
    %731 = vst [vmem:[#allocation10 + $0x1c8] sm:$0xff] %v667
    %732 = vst [vmem:[#allocation10 + $0x1d0] sm:$0xff] %v668
    %733 = vst [vmem:[#allocation10 + $0x1d8] sm:$0xff] %v669
    %734 = vst [vmem:[#allocation10 + $0x1e0] sm:$0xff] %v670
    %735 = vst [vmem:[#allocation10 + $0x1e8] sm:$0xff] %v671
    %736 = vst [vmem:[#allocation10 + $0x1f0] sm:$0xff] %v672
    %737 = vst [vmem:[#allocation10 + $0x1f8] sm:$0xff] %v673
    // Predicated region
    $region22: #{tpu_custom_call.1} parent=1 // pred_check
      _
    $region23: #{tpu_custom_call.1} parent=1 // pred_check_branch
      %739 = sbr.rel (0) target = $region25
    $region24: #{tpu_custom_call.1} parent=1 // pred_region
      %s740 = sld [smem:[#allocation3]]
      %s741 = sld [smem:[#allocation4]]
      %s742 = smul.u32 32, %s740
      %s743 = smul.u32 2, %s741
      %s745 = ssub.s32 8192, 8192
      %746 = vsyncadd [#allocation7], %s745
      %s747 = smul.addr %s742, 2
      %s748 = sadd.s32 %s743, %s747
      %s749 = smul.addr %s748, 128
      %s750 = scalar_lea.hbm %s4, %s749
      %s751 = sshll.u32 [#allocation10], 4
      %s752 = int_to_ptr.vmem [resolvable:$true] %s751
      %757 = dma.vmem_to_hbm [thread:$0]  %s752, 8192, %s750, [#allocation7], 256, 256, 16
    $region25: #{tpu_custom_call.1} parent=1 // pred_fallthru
      _
    // Predicated region
    $region26: #{tpu_custom_call.1} parent=1 // pred_check
      _
    $region27: #{tpu_custom_call.1} parent=1 // pred_check_branch
      %759 = sbr.rel (0) target = $region29
    $region28: #{tpu_custom_call.1} parent=1 // pred_region
      %760 = dma.done [#allocation7], 8192
    $region29: #{tpu_custom_call.1} parent=1 // pred_fallthru
      _
    %761 = vsyncpa [#allocation6], 1
    %762 = vsyncpa [#allocation9], 1
    %763 = vsyncpa [#allocation7], 1

</llo_original>
